<compile_context>
chip_gen: v7x
topology: tpu7x:2x2x1
jax: 0.10.0
libtpu: 0.0.40
codegen_flags: <defaults>
</compile_context>

<pallas_src>
import math

import jax
import jax.numpy as jnp
from jax.experimental import pallas as pl
from jax.experimental.pallas import tpu as pltpu


_NODE_TILE_CAP = 1024     # M tile cap for the node dimension (output rows)
_FEATURE_TILE_CAP = 512   # tile cap for feature dims and any K axis


# ---------------------------------------------------------------------------
# Tiling helpers
# ---------------------------------------------------------------------------
def _round_up(x: int, m: int) -> int:
    return ((x + m - 1) // m) * m


def _pick_tile_and_pad(dim: int, cap: int, max_waste: float = 0.25):
    """Pick a 128-multiple tile <= cap first, then pad dim to a multiple of it.

    Never falls back to 128 just because the 128-padded dim is not divisible
    by a bigger tile; accepts at most `max_waste` relative padding overhead.
    Returns (tile, padded_dim) with padded_dim % tile == 0.
    """
    dim128 = _round_up(dim, 128)
    if dim128 <= cap:
        return dim128, dim128
    for t in range(cap, 127, -128):
        padded = _round_up(dim, t)
        if padded <= dim128 * (1.0 + max_waste):
            return t, padded
    return 128, dim128  # unreachable in practice (t=128 always accepted)


def _divisor_tile(padded_dim: int, cap: int) -> int:
    """Largest 128-multiple tile <= cap that evenly divides padded_dim."""
    for t in range(min(cap, padded_dim), 127, -128):
        if padded_dim % t == 0:
            return t
    return 128


def _pad2d(a, rows: int, cols: int, dtype):
    r, c = a.shape
    return jnp.zeros((rows, cols), dtype).at[:r, :c].set(a.astype(dtype))


def _pad_bias(b, cols: int):
    return jnp.zeros((1, cols), jnp.float32).at[0, : b.shape[0]].set(
        b.astype(jnp.float32)
    )


# ---------------------------------------------------------------------------
# Tiled matmul kernel (optionally fused bias + leaky_relu epilogue)
# ---------------------------------------------------------------------------
def _make_matmul_kernel(apply_bias: bool, apply_act: bool,
                        negative_slope: float, multi_k: bool):
    def _epilogue(out, b_ref, o_ref):
        if apply_bias:
            out = out + b_ref[...]                       # f32 epilogue
        if apply_act:
            out = jnp.where(out >= 0.0, out, negative_slope * out)
        o_ref[...] = out.astype(o_ref.dtype)

    if multi_k:
        def kernel(*refs):
            if apply_bias:
                x_ref, w_ref, b_ref, o_ref, acc_ref = refs
            else:
                x_ref, w_ref, o_ref, acc_ref = refs
                b_ref = None
            k = pl.program_id(2)

            @pl.when(k == 0)
            def _init():
                acc_ref[...] = jnp.zeros_like(acc_ref)

            acc_ref[...] += jnp.dot(
                x_ref[...], w_ref[...], preferred_element_type=jnp.float32
            )

            @pl.when(k == pl.num_programs(2) - 1)
            def _finalize():
                _epilogue(acc_ref[...], b_ref, o_ref)
    else:
        # K fits a single tile: one MXU pass per output tile, no scratch.
        def kernel(*refs):
            if apply_bias:
                x_ref, w_ref, b_ref, o_ref = refs
            else:
                x_ref, w_ref, o_ref = refs
                b_ref = None
            out = jnp.dot(
                x_ref[...], w_ref[...], preferred_element_type=jnp.float32
            )
            _epilogue(out, b_ref, o_ref)

    return kernel


def _pallas_matmul_padded(
    x_p, w_p, b_p=None, *, apply_act: bool, negative_slope: float = 0.25,
    out_dtype=jnp.bfloat16, tm: int, tn: int, tk: int,
):
    """out = act( x_p @ w_p + b_p ) on already padded / bf16 operands.

    Output is returned in padded form (Mp, Np) with dtype out_dtype.
    """
    Mp, Kp = x_p.shape
    Kp2, Np = w_p.shape
    assert Kp == Kp2, (Kp, Kp2)
    assert Mp % tm == 0 and Np % tn == 0 and Kp % tk == 0, (Mp, Np, Kp, tm, tn, tk)

    nk = Kp // tk
    multi_k = nk > 1
    apply_bias = b_p is not None
    kernel = _make_matmul_kernel(apply_bias, apply_act, negative_slope, multi_k)

    if multi_k:
        grid = (Mp // tm, Np // tn, nk)
        in_specs = [
            pl.BlockSpec((tm, tk), lambda i, j, k: (i, k)),
            pl.BlockSpec((tk, tn), lambda i, j, k: (k, j)),
        ]
        if apply_bias:  # bias block resident over k; added once in finalize
            in_specs.append(pl.BlockSpec((1, tn), lambda i, j, k: (0, j)))
        out_spec = pl.BlockSpec((tm, tn), lambda i, j, k: (i, j))
        scratch = [pltpu.VMEM((tm, tn), jnp.float32)]
        dims = ("parallel", "parallel", "arbitrary")
    else:
        grid = (Mp // tm, Np // tn)
        in_specs = [
            pl.BlockSpec((tm, tk), lambda i, j: (i, 0)),
            pl.BlockSpec((tk, tn), lambda i, j: (0, j)),
        ]
        if apply_bias:
            in_specs.append(pl.BlockSpec((1, tn), lambda i, j: (0, j)))
        out_spec = pl.BlockSpec((tm, tn), lambda i, j: (i, j))
        scratch = []
        dims = ("parallel", "parallel")

    # VMEM footprint estimate: double-buffered bf16 inputs + out + acc scratch.
    out_bytes = jnp.dtype(out_dtype).itemsize
    est = 2 * (tm * tk + tk * tn) * 2 + 2 * tm * tn * out_bytes
    if multi_k:
        est += tm * tn * 4
    if apply_bias:
        est += 2 * tn * 4
    # Raise the scoped VMEM limit (v5e default 16 MiB) but stay <= 48 MiB so it
    # also fits comfortably inside v7x's 64 MiB per-TensorCore VMEM.
    vmem_limit = int(min(max(2 * est, 32 * 1024 * 1024), 48 * 1024 * 1024))

    args = (x_p, w_p) + ((b_p,) if apply_bias else ())
    return pl.pallas_call(
        kernel,
        out_shape=jax.ShapeDtypeStruct((Mp, Np), out_dtype),
        grid_spec=pltpu.PrefetchScalarGridSpec(
            num_scalar_prefetch=0,
            grid=grid,
            in_specs=in_specs,
            out_specs=out_spec,
            scratch_shapes=scratch,
        ),
        compiler_params=pltpu.CompilerParams(
            dimension_semantics=dims,
            vmem_limit_bytes=vmem_limit,
        ),
    )(*args)


# ---------------------------------------------------------------------------
# GCN_E_2 forward (everything padded once, intermediates kept bf16)
# ---------------------------------------------------------------------------
def gcn_e_2_forward(x, adj, params, *, dropout_rate=0.5, training=False,
                    negative_slope=0.25, compute_dtype=jnp.bfloat16):
    """Forward pass of GCN_E_2 (eval mode: dropout is identity)."""
    w1, b1, w2, b2 = params
    M, in_dim = x.shape
    hg_dim = w1.shape[1]
    out_dim = w2.shape[1]
    assert adj.shape == (M, M)
    assert w1.shape[0] == in_dim and w2.shape[0] == hg_dim

    # --- pick tiles / padded sizes once -------------------------------------
    node_tile, Mp = _pick_tile_and_pad(M, cap=_NODE_TILE_CAP)
    # v7x has 2 TensorCores sharding the "parallel" axes: if the whole node dim
    # fits one tile, split it so both cores get work.
    if Mp // node_tile < 2 and node_tile >= 256 and (node_tile // 2) % 128 == 0:
        node_tile //= 2
    node_k_tile = _divisor_tile(Mp, _FEATURE_TILE_CAP)      # K tile over nodes

    t_in, Ip = _pick_tile_and_pad(in_dim, cap=_FEATURE_TILE_CAP)
    t_hg, Hp = _pick_tile_and_pad(hg_dim, cap=_FEATURE_TILE_CAP)
    t_out, Op = _pick_tile_and_pad(out_dim, cap=_FEATURE_TILE_CAP)

    # --- pad + cast every operand exactly once -------------------------------
    # TODO(synk): adj is treated as dense; torch.sparse.mm's sparse adjacency
    #             would need a CSR/gather Pallas kernel.
    adj_p = _pad2d(adj, Mp, Mp, compute_dtype)
    x_p = _pad2d(x, Mp, Ip, compute_dtype)
    w1_p = _pad2d(w1, Ip, Hp, compute_dtype)
    w2_p = _pad2d(w2, Hp, Op, compute_dtype)
    b1_p = _pad_bias(b1, Hp)
    b2_p = _pad_bias(b2, Op)

    def layer(h_in_p, w_p, b_p, t_kin, t_nout, out_dtype):
        """leaky_relu( adj @ (h @ W) + b ), on padded operands, padded output."""
        if w_p.shape[0] <= w_p.shape[1]:
            # (adj @ h) @ W : contract the N^2 adjacency against the thinner
            # feature operand (fewer FLOPs + smaller intermediate).
            t = _pallas_matmul_padded(
                adj_p, h_in_p, None, apply_act=False,
                out_dtype=compute_dtype,
                tm=node_tile, tn=t_kin, tk=node_k_tile)
            return _pallas_matmul_padded(
                t, w_p, b_p, apply_act=True, negative_slope=negative_slope,
                out_dtype=out_dtype,
                tm=node_tile, tn=t_nout, tk=t_kin)
        else:
            s = _pallas_matmul_padded(
                h_in_p, w_p, None, apply_act=False,
                out_dtype=compute_dtype,
                tm=node_tile, tn=t_nout, tk=t_kin)
            return _pallas_matmul_padded(
                adj_p, s, b_p, apply_act=True, negative_slope=negative_slope,
                out_dtype=out_dtype,
                tm=node_tile, tn=t_nout, tk=node_k_tile)

    # TODO(synk): training-mode dropout (pltpu.prng_random_bits mask) not
    #             implemented; eval-mode dropout is the identity.
    h_p = layer(x_p, w1_p, b1_p, t_in, t_hg, compute_dtype)   # gc1, bf16 interm.
    y_p = layer(h_p, w2_p, b2_p, t_hg, t_out, jnp.float32)    # gc2, final f32

    return y_p[:M, :out_dim]        # slice padding away once, at the very end


def init_gcn_e_2(key, in_dim, hgcn_dim, out_dim, dtype=jnp.float32):
    """Xavier-normal weights (std = sqrt(2/(fan_in+fan_out))), zero biases."""
    k1, k2 = jax.random.split(key)
    std1 = math.sqrt(2.0 / (in_dim + hgcn_dim))
    std2 = math.sqrt(2.0 / (hgcn_dim + out_dim))
    w1 = jax.random.normal(k1, (in_dim, hgcn_dim), dtype=dtype) * std1
    w2 = jax.random.normal(k2, (hgcn_dim, out_dim), dtype=dtype) * std2
    b1 = jnp.zeros((hgcn_dim,), dtype=dtype)
    b2 = jnp.zeros((out_dim,), dtype=dtype)
    return w1, b1, w2, b2


# ---------------------------------------------------------------------------
if __name__ == "__main__":
    key = jax.random.PRNGKey(0)
    kx, kadj, kp, kb1, kb2 = jax.random.split(key, 5)

    num_nodes, in_dim, hgcn_dim, out_dim = 16, 8, 32, 12

    x = jax.random.normal(kx, (num_nodes, in_dim), dtype=jnp.float32)

    # Symmetric, self-looped, row-normalized dense adjacency.
    a = jax.random.uniform(kadj, (num_nodes, num_nodes), dtype=jnp.float32)
    a = 0.5 * (a + a.T) + jnp.eye(num_nodes, dtype=jnp.float32)
    adj = a / a.sum(axis=1, keepdims=True)

    w1, b1, w2, b2 = init_gcn_e_2(kp, in_dim, hgcn_dim, out_dim)
    # Nonzero biases so the fused bias path is actually exercised.
    b1 = 0.1 * jax.random.normal(kb1, (hgcn_dim,), dtype=jnp.float32)
    b2 = 0.1 * jax.random.normal(kb2, (out_dim,), dtype=jnp.float32)
    params = (w1, b1, w2, b2)

    y = jax.jit(gcn_e_2_forward)(x, adj, params)
    jax.block_until_ready(y)

    # Reference (pure JAX) mirroring the kernel's bf16-operand / f32-accum
    # scheme, bf16 intermediates and per-layer contraction-order choice.
    def _bf16(v):
        return v.astype(jnp.bfloat16).astype(jnp.float32)

    def ref_layer(h, w, b):
        if w.shape[0] <= w.shape[1]:
            t = _bf16(_bf16(adj) @ _bf16(h))          # bf16 intermediate
            o = _bf16(t) @ _bf16(w) + b
        else:
            s = _bf16(_bf16(h) @ _bf16(w))            # bf16 intermediate
            o = _bf16(adj) @ _bf16(s) + b
        return jnp.where(o >= 0, o, 0.25 * o)

    y_ref = ref_layer(_bf16(ref_layer(x, w1, b1)), w2, b2)

    assert y.shape == (num_nodes, out_dim)
    assert jnp.allclose(y, y_ref, atol=1e-2, rtol=1e-2), (
        float(jnp.max(jnp.abs(y - y_ref)))
    )

    print("KERNEL_OK")
</pallas_src>

<mosaic_0001>
module attributes {stable_mosaic.version = 11 : i64} {
  func.func @kernel(%arg0: i32, %arg1: i32, %arg2: memref<128x128xbf16, #tpu.memory_space<vmem>>, %arg3: memref<128x128xbf16, #tpu.memory_space<vmem>>, %arg4: memref<128x128xbf16, #tpu.memory_space<vmem>>) attributes {dimension_semantics = [#tpu.dimension_semantics<parallel>, #tpu.dimension_semantics<parallel>], iteration_bounds = array<i64: 1, 1>, scalar_prefetch = 0 : i64, scratch_operands = 0 : i64, tpu.core_type = #tpu.core_type<tc>, window_params = [{transform_indices = @transform_0, window_bounds = array<i64: 128, 128>}, {transform_indices = @transform_1, window_bounds = array<i64: 128, 128>}, {transform_indices = @transform_2, window_bounds = array<i64: 128, 128>}]} {
    %c0 = arith.constant 0 : index
    %c0_0 = arith.constant 0 : index
    %0 = vector.load %arg2[%c0, %c0_0] : memref<128x128xbf16, #tpu.memory_space<vmem>>, vector<128x128xbf16>
    %c0_1 = arith.constant 0 : index
    %c0_2 = arith.constant 0 : index
    %1 = vector.load %arg3[%c0_1, %c0_2] : memref<128x128xbf16, #tpu.memory_space<vmem>>, vector<128x128xbf16>
    %cst = arith.constant dense<0.000000e+00> : vector<128x128xf32>
    %2 = tpu.matmul %0, %1, %cst {dimension_numbers = #tpu.dot_dimension_numbers<[1], [0], [0], [1], [0, 0, 1, 1], [], []>} : vector<128x128xbf16>, vector<128x128xbf16>, vector<128x128xf32> -> vector<128x128xf32>
    %3 = arith.truncf %2 : vector<128x128xf32> to vector<128x128xbf16>
    %c0_3 = arith.constant 0 : index
    %c0_4 = arith.constant 0 : index
    %4 = vector.load %arg4[%c0_3, %c0_4] : memref<128x128xbf16, #tpu.memory_space<vmem>>, vector<128x128xbf16>
    tpu.vector_store %arg4[%c0_3, %c0_4], %3 {strides = array<i32>} : memref<128x128xbf16, #tpu.memory_space<vmem>>, vector<128x128xbf16>,
    return
  }
  func.func @transform_0(%arg0: i32, %arg1: i32) -> (i32, i32) {
    %c0_i32 = arith.constant 0 : i32
    %c0_i32_0 = arith.constant 0 : i32
    return %arg0, %c0_i32 : i32, i32
  }
  func.func @transform_1(%arg0: i32, %arg1: i32) -> (i32, i32) {
    %c0_i32 = arith.constant 0 : i32
    %c0_i32_0 = arith.constant 0 : i32
    return %c0_i32, %arg1 : i32, i32
  }
  func.func @transform_2(%arg0: i32, %arg1: i32) -> (i32, i32) {
    %c0_i32 = arith.constant 0 : i32
    return %arg0, %arg1 : i32, i32
  }
}

module attributes {stable_mosaic.version = 11 : i64} {
  func.func @kernel(%arg0: i32, %arg1: i32, %arg2: memref<128x128xbf16, #tpu.memory_space<vmem>>, %arg3: memref<128x128xbf16, #tpu.memory_space<vmem>>, %arg4: memref<1x128xf32, #tpu.memory_space<vmem>>, %arg5: memref<128x128xbf16, #tpu.memory_space<vmem>>) attributes {dimension_semantics = [#tpu.dimension_semantics<parallel>, #tpu.dimension_semantics<parallel>], iteration_bounds = array<i64: 1, 1>, scalar_prefetch = 0 : i64, scratch_operands = 0 : i64, tpu.core_type = #tpu.core_type<tc>, window_params = [{transform_indices = @transform_0, window_bounds = array<i64: 128, 128>}, {transform_indices = @transform_1, window_bounds = array<i64: 128, 128>}, {transform_indices = @transform_2, window_bounds = array<i64: 1, 128>}, {transform_indices = @transform_3, window_bounds = array<i64: 128, 128>}]} {
    %c0 = arith.constant 0 : index
    %c0_0 = arith.constant 0 : index
    %0 = vector.load %arg2[%c0, %c0_0] : memref<128x128xbf16, #tpu.memory_space<vmem>>, vector<128x128xbf16>
    %c0_1 = arith.constant 0 : index
    %c0_2 = arith.constant 0 : index
    %1 = vector.load %arg3[%c0_1, %c0_2] : memref<128x128xbf16, #tpu.memory_space<vmem>>, vector<128x128xbf16>
    %cst = arith.constant dense<0.000000e+00> : vector<128x128xf32>
    %2 = tpu.matmul %0, %1, %cst {dimension_numbers = #tpu.dot_dimension_numbers<[1], [0], [0], [1], [0, 0, 1, 1], [], []>} : vector<128x128xbf16>, vector<128x128xbf16>, vector<128x128xf32> -> vector<128x128xf32>
    %c0_3 = arith.constant 0 : index
    %c0_4 = arith.constant 0 : index
    %3 = vector.load %arg4[%c0_3, %c0_4] : memref<1x128xf32, #tpu.memory_space<vmem>>, vector<1x128xf32>
    %4 = vector.broadcast %3 : vector<1x128xf32> to vector<128x128xf32>
    %5 = arith.addf %2, %4 : vector<128x128xf32>
    %cst_5 = arith.constant 0.000000e+00 : f32
    %6 = vector.broadcast %cst_5 : f32 to vector<128x128xf32>
    %7 = arith.cmpf oge, %5, %6 : vector<128x128xf32>
    %cst_6 = arith.constant 2.500000e-01 : f32
    %8 = vector.broadcast %cst_6 : f32 to vector<128x128xf32>
    %9 = arith.mulf %8, %5 : vector<128x128xf32>
    %10 = arith.select %7, %5, %9 : vector<128x128xi1>, vector<128x128xf32>
    %11 = arith.truncf %10 : vector<128x128xf32> to vector<128x128xbf16>
    %c0_7 = arith.constant 0 : index
    %c0_8 = arith.constant 0 : index
    %12 = vector.load %arg5[%c0_7, %c0_8] : memref<128x128xbf16, #tpu.memory_space<vmem>>, vector<128x128xbf16>
    tpu.vector_store %arg5[%c0_7, %c0_8], %11 {strides = array<i32>} : memref<128x128xbf16, #tpu.memory_space<vmem>>, vector<128x128xbf16>,
    return
  }
  func.func @transform_0(%arg0: i32, %arg1: i32) -> (i32, i32) {
    %c0_i32 = arith.constant 0 : i32
    %c0_i32_0 = arith.constant 0 : i32
    return %arg0, %c0_i32 : i32, i32
  }
  func.func @transform_1(%arg0: i32, %arg1: i32) -> (i32, i32) {
    %c0_i32 = arith.constant 0 : i32
    %c0_i32_0 = arith.constant 0 : i32
    return %c0_i32, %arg1 : i32, i32
  }
  func.func @transform_2(%arg0: i32, %arg1: i32) -> (i32, i32) {
    %c0_i32 = arith.constant 0 : i32
    %c0_i32_0 = arith.constant 0 : i32
    return %c0_i32, %arg1 : i32, i32
  }
  func.func @transform_3(%arg0: i32, %arg1: i32) -> (i32, i32) {
    %c0_i32 = arith.constant 0 : i32
    return %arg0, %arg1 : i32, i32
  }
}

module attributes {stable_mosaic.version = 11 : i64} {
  func.func @kernel(%arg0: i32, %arg1: i32, %arg2: memref<128x128xbf16, #tpu.memory_space<vmem>>, %arg3: memref<128x128xbf16, #tpu.memory_space<vmem>>, %arg4: memref<1x128xf32, #tpu.memory_space<vmem>>, %arg5: memref<128x128xf32, #tpu.memory_space<vmem>>) attributes {dimension_semantics = [#tpu.dimension_semantics<parallel>, #tpu.dimension_semantics<parallel>], iteration_bounds = array<i64: 1, 1>, scalar_prefetch = 0 : i64, scratch_operands = 0 : i64, tpu.core_type = #tpu.core_type<tc>, window_params = [{transform_indices = @transform_0, window_bounds = array<i64: 128, 128>}, {transform_indices = @transform_1, window_bounds = array<i64: 128, 128>}, {transform_indices = @transform_2, window_bounds = array<i64: 1, 128>}, {transform_indices = @transform_3, window_bounds = array<i64: 128, 128>}]} {
    %c0 = arith.constant 0 : index
    %c0_0 = arith.constant 0 : index
    %0 = vector.load %arg2[%c0, %c0_0] : memref<128x128xbf16, #tpu.memory_space<vmem>>, vector<128x128xbf16>
    %c0_1 = arith.constant 0 : index
    %c0_2 = arith.constant 0 : index
    %1 = vector.load %arg3[%c0_1, %c0_2] : memref<128x128xbf16, #tpu.memory_space<vmem>>, vector<128x128xbf16>
    %cst = arith.constant dense<0.000000e+00> : vector<128x128xf32>
    %2 = tpu.matmul %0, %1, %cst {dimension_numbers = #tpu.dot_dimension_numbers<[1], [0], [0], [1], [0, 0, 1, 1], [], []>} : vector<128x128xbf16>, vector<128x128xbf16>, vector<128x128xf32> -> vector<128x128xf32>
    %c0_3 = arith.constant 0 : index
    %c0_4 = arith.constant 0 : index
    %3 = vector.load %arg4[%c0_3, %c0_4] : memref<1x128xf32, #tpu.memory_space<vmem>>, vector<1x128xf32>
    %4 = vector.broadcast %3 : vector<1x128xf32> to vector<128x128xf32>
    %5 = arith.addf %2, %4 : vector<128x128xf32>
    %cst_5 = arith.constant 0.000000e+00 : f32
    %6 = vector.broadcast %cst_5 : f32 to vector<128x128xf32>
    %7 = arith.cmpf oge, %5, %6 : vector<128x128xf32>
    %cst_6 = arith.constant 2.500000e-01 : f32
    %8 = vector.broadcast %cst_6 : f32 to vector<128x128xf32>
    %9 = arith.mulf %8, %5 : vector<128x128xf32>
    %10 = arith.select %7, %5, %9 : vector<128x128xi1>, vector<128x128xf32>
    %c0_7 = arith.constant 0 : index
    %c0_8 = arith.constant 0 : index
    %11 = vector.load %arg5[%c0_7, %c0_8] : memref<128x128xf32, #tpu.memory_space<vmem>>, vector<128x128xf32>
    tpu.vector_store %arg5[%c0_7, %c0_8], %10 {strides = array<i32>} : memref<128x128xf32, #tpu.memory_space<vmem>>, vector<128x128xf32>,
    return
  }
  func.func @transform_0(%arg0: i32, %arg1: i32) -> (i32, i32) {
    %c0_i32 = arith.constant 0 : i32
    %c0_i32_0 = arith.constant 0 : i32
    return %arg0, %c0_i32 : i32, i32
  }
  func.func @transform_1(%arg0: i32, %arg1: i32) -> (i32, i32) {
    %c0_i32 = arith.constant 0 : i32
    %c0_i32_0 = arith.constant 0 : i32
    return %c0_i32, %arg1 : i32, i32
  }
  func.func @transform_2(%arg0: i32, %arg1: i32) -> (i32, i32) {
    %c0_i32 = arith.constant 0 : i32
    %c0_i32_0 = arith.constant 0 : i32
    return %c0_i32, %arg1 : i32, i32
  }
  func.func @transform_3(%arg0: i32, %arg1: i32) -> (i32, i32) {
    %c0_i32 = arith.constant 0 : i32
    return %arg0, %arg1 : i32, i32
  }
}

</mosaic_0001>

<llo_original>
// kernel: gcn_e_2_forward.5
$region0: #{gcn_e_2_forward.5}
  #allocation0 [shape = 'u32[]', space=smem, size = 0x4, offset = 0x4, fixed_abs, tag = 'smem constant byte address 0x4 - core index']
  #allocation1 [shape = 'u32[144,128]{1,0:T(1,128)}', space=vmem, size = 0x12000, scoped, tag = 'internal scratch']
  %s0 = inlined_call_operand.vmem [shape: bf16[128,128], index: 0, kind: input, shape index: {}]
  %s1 = inlined_call_operand.vmem [shape: bf16[128,128], index: 1, kind: input, shape index: {}]
  %s2 = inlined_call_operand.vmem [shape: f32[1,128], index: 2, kind: input, shape index: {}]
  %s3 = inlined_call_operand.vmem [shape: bf16[128,128], index: 3, kind: output, shape index: {}]
  %s4 = sld [smem:[#allocation0]]
  $region22: #{gcn_e_2_forward.5} parent=0
    _
  %s6 = ssub.s32 1, %s4
  %s7 = scalar_select 0, %s6, %s4
  // Predicated region
  $region2: #{gcn_e_2_forward.5} parent=0 // pred_check
    _
  $region3: #{gcn_e_2_forward.5} parent=0 // pred_check_branch
    %9 = sbr.rel (0) target = $region5
  $region4: #{gcn_e_2_forward.5} parent=0 // pred_region
    _
  $region5: #{gcn_e_2_forward.5} parent=0 // pred_fallthru
    _
  // Predicated region
  $region6: #{gcn_e_2_forward.5} parent=0 // pred_check
    _
  $region7: #{gcn_e_2_forward.5} parent=0 // pred_check_branch
    %11 = sbr.rel (0) target = $region9
  $region8: #{gcn_e_2_forward.5} parent=0 // pred_region
    _
  $region9: #{gcn_e_2_forward.5} parent=0 // pred_fallthru
    _
  // Predicated region
  $region10: #{gcn_e_2_forward.5} parent=0 // pred_check
    _
  $region11: #{gcn_e_2_forward.5} parent=0 // pred_check_branch
    %13 = sbr.rel (0) target = $region13
  $region12: #{gcn_e_2_forward.5} parent=0 // pred_region
    _
  $region13: #{gcn_e_2_forward.5} parent=0 // pred_fallthru
    _
  %v15 = vld [vmem:[%s0] sm:$0xf]
  %v16 = vld [vmem:[%s0 + $0x4] sm:$0xf]
  %v17 = vld [vmem:[%s0 + $0x8] sm:$0xf]
  %v18 = vld [vmem:[%s0 + $0xc] sm:$0xf]
  %v19 = vld [vmem:[%s0 + $0x10] sm:$0xf]
  %v20 = vld [vmem:[%s0 + $0x14] sm:$0xf]
  %v21 = vld [vmem:[%s0 + $0x18] sm:$0xf]
  %v22 = vld [vmem:[%s0 + $0x1c] sm:$0xf]
  %v23 = vld [vmem:[%s0 + $0x20] sm:$0xf]
  %v24 = vld [vmem:[%s0 + $0x24] sm:$0xf]
  %v25 = vld [vmem:[%s0 + $0x28] sm:$0xf]
  %v26 = vld [vmem:[%s0 + $0x2c] sm:$0xf]
  %v27 = vld [vmem:[%s0 + $0x30] sm:$0xf]
  %v28 = vld [vmem:[%s0 + $0x34] sm:$0xf]
  %v29 = vld [vmem:[%s0 + $0x38] sm:$0xf]
  %v30 = vld [vmem:[%s0 + $0x3c] sm:$0xf]
  %v31 = vld [vmem:[%s1] sm:$0xf]
  %v32 = vld [vmem:[%s1 + $0x4] sm:$0xf]
  %v33 = vld [vmem:[%s1 + $0x8] sm:$0xf]
  %v34 = vld [vmem:[%s1 + $0xc] sm:$0xf]
  %v35 = vld [vmem:[%s1 + $0x10] sm:$0xf]
  %v36 = vld [vmem:[%s1 + $0x14] sm:$0xf]
  %v37 = vld [vmem:[%s1 + $0x18] sm:$0xf]
  %v38 = vld [vmem:[%s1 + $0x1c] sm:$0xf]
  %v39 = vld [vmem:[%s1 + $0x20] sm:$0xf]
  %v40 = vld [vmem:[%s1 + $0x24] sm:$0xf]
  %v41 = vld [vmem:[%s1 + $0x28] sm:$0xf]
  %v42 = vld [vmem:[%s1 + $0x2c] sm:$0xf]
  %v43 = vld [vmem:[%s1 + $0x30] sm:$0xf]
  %v44 = vld [vmem:[%s1 + $0x34] sm:$0xf]
  %v45 = vld [vmem:[%s1 + $0x38] sm:$0xf]
  %v46 = vld [vmem:[%s1 + $0x3c] sm:$0xf]
  %v47 = vld [vmem:[%s2] sm:$0x1]
  %v49 = vlaneseq
  %v50 = vshrl.u32 %v49, 7
  %v51 = vsub.s32 0, %v50
  %v52 = vrot.slane %v47, %v51
  %v70 = vunpack.c.l.b16 %v15
  %v71 = vunpack.c.l.b16 %v16
  %v72 = vunpack.c.l.b16 %v17
  %v73 = vunpack.c.l.b16 %v18
  %v74 = vunpack.c.l.b16 %v19
  %v75 = vunpack.c.l.b16 %v20
  %v76 = vunpack.c.l.b16 %v21
  %v77 = vunpack.c.l.b16 %v22
  %v78 = vunpack.c.l.b16 %v23
  %v79 = vunpack.c.l.b16 %v24
  %v80 = vunpack.c.l.b16 %v25
  %v81 = vunpack.c.l.b16 %v26
  %v82 = vunpack.c.l.b16 %v27
  %v83 = vunpack.c.l.b16 %v28
  %v84 = vunpack.c.l.b16 %v29
  %v85 = vunpack.c.l.b16 %v30
  %v86 = vpack.c.b16 %v71, %v70
  %v87 = vpack.c.b16 %v73, %v72
  %v88 = vpack.c.b16 %v75, %v74
  %v89 = vpack.c.b16 %v77, %v76
  %v90 = vpack.c.b16 %v79, %v78
  %v91 = vpack.c.b16 %v81, %v80
  %v92 = vpack.c.b16 %v83, %v82
  %v93 = vpack.c.b16 %v85, %v84
  %v118 = vunpack.c.l.b16 %v31
  %v119 = vunpack.c.l.b16 %v32
  %v120 = vunpack.c.l.b16 %v33
  %v121 = vunpack.c.l.b16 %v34
  %v122 = vunpack.c.l.b16 %v35
  %v123 = vunpack.c.l.b16 %v36
  %v124 = vunpack.c.l.b16 %v37
  %v125 = vunpack.c.l.b16 %v38
  %v126 = vunpack.c.l.b16 %v39
  %v127 = vunpack.c.l.b16 %v40
  %v128 = vunpack.c.l.b16 %v41
  %v129 = vunpack.c.l.b16 %v42
  %v130 = vunpack.c.l.b16 %v43
  %v131 = vunpack.c.l.b16 %v44
  %v132 = vunpack.c.l.b16 %v45
  %v133 = vunpack.c.l.b16 %v46
  %v134 = vpack.c.b16 %v119, %v118
  %v135 = vpack.c.b16 %v121, %v120
  %v136 = vpack.c.b16 %v123, %v122
  %v137 = vpack.c.b16 %v125, %v124
  %v138 = vpack.c.b16 %v127, %v126
  %v139 = vpack.c.b16 %v129, %v128
  %v140 = vpack.c.b16 %v131, %v130
  %v141 = vpack.c.b16 %v133, %v132
  %150 = vmatprep.subr.bf16.mxu0 0
  %151 = vmatpush1.bf16.msra.mxu0 %v134
  %152 = vmatprep.subr.bf16.mxu0 0
  %153 = vmatpush1.bf16.msra.mxu0 %v135
  %154 = vmatprep.subr.bf16.mxu0 0
  %155 = vmatpush1.bf16.msra.mxu0 %v136
  %156 = vmatprep.subr.bf16.mxu0 0
  %157 = vmatpush1.bf16.msra.mxu0 %v137
  %158 = vmatprep.subr.bf16.mxu0 0
  %159 = vmatpush1.bf16.msra.mxu0 %v138
  %160 = vmatprep.subr.bf16.mxu0 0
  %161 = vmatpush1.bf16.msra.mxu0 %v139
  %162 = vmatprep.subr.bf16.mxu0 0
  %163 = vmatpush1.bf16.msra.mxu0 %v140
  %164 = vmatprep.subr.bf16.mxu0 0
  %165 = vmatpush1.bf16.msra.mxu0 %v141
  %166 = vmatprep.subr.bf16.mxu0 0
  %167 = vmatpush1.bf16.msra.mxu0 0
  %168 = vmatprep.subr.bf16.mxu0 0
  %169 = vmatpush1.bf16.msra.mxu0 0
  %170 = vmatprep.subr.bf16.mxu0 0
  %171 = vmatpush1.bf16.msra.mxu0 0
  %172 = vmatprep.subr.bf16.mxu0 0
  %173 = vmatpush1.bf16.msra.mxu0 0
  %174 = vmatprep.subr.bf16.mxu0 0
  %175 = vmatpush1.bf16.msra.mxu0 0
  %176 = vmatprep.subr.bf16.mxu0 0
  %177 = vmatpush1.bf16.msra.mxu0 0
  %178 = vmatprep.subr.bf16.mxu0 0
  %179 = vmatpush1.bf16.msra.mxu0 0
  %180 = vmatprep.subr.bf16.mxu0 0
  %181 = vmatpush1.bf16.msra.mxu0 0
  %182 = vmatprep.mubr.bf16.mxu0 0
  %183 = vmatmul.mubr.bf16.gmra.mrb[0].mxu0 %v86
  %v184 = vpop.f32.mrb[0].mxu0
  %v185 = vadd.f32 %v52, %v184
  %v186 = vpop.f32.mrb[0].mxu0
  %v187 = vpop.f32.mrb[0].mxu0
  %v188 = vadd.f32 %v52, %v187
  %v189 = vpop.f32.mrb[0].mxu0
  %190 = vmatprep.mubr.bf16.mxu0 0
  %191 = vmatmul.mubr.bf16.gmra.mrb[0].mxu0 %v87
  %v192 = vpop.f32.mrb[0].mxu0
  %v193 = vadd.f32 %v52, %v192
  %v194 = vpop.f32.mrb[0].mxu0
  %v195 = vpop.f32.mrb[0].mxu0
  %v196 = vadd.f32 %v52, %v195
  %v197 = vpop.f32.mrb[0].mxu0
  %198 = vmatprep.mubr.bf16.mxu0 0
  %199 = vmatmul.mubr.bf16.gmra.mrb[0].mxu0 %v88
  %v200 = vpop.f32.mrb[0].mxu0
  %v201 = vadd.f32 %v52, %v200
  %v202 = vpop.f32.mrb[0].mxu0
  %v203 = vpop.f32.mrb[0].mxu0
  %v204 = vadd.f32 %v52, %v203
  %v205 = vpop.f32.mrb[0].mxu0
  %206 = vmatprep.mubr.bf16.mxu0 0
  %207 = vmatmul.mubr.bf16.gmra.mrb[0].mxu0 %v89
  %v208 = vpop.f32.mrb[0].mxu0
  %v209 = vadd.f32 %v52, %v208
  %v210 = vpop.f32.mrb[0].mxu0
  %v211 = vpop.f32.mrb[0].mxu0
  %v212 = vadd.f32 %v52, %v211
  %v213 = vpop.f32.mrb[0].mxu0
  %214 = vmatprep.mubr.bf16.mxu0 0
  %215 = vmatmul.mubr.bf16.gmra.mrb[0].mxu0 %v90
  %v216 = vpop.f32.mrb[0].mxu0
  %v217 = vadd.f32 %v52, %v216
  %v218 = vpop.f32.mrb[0].mxu0
  %v219 = vpop.f32.mrb[0].mxu0
  %v220 = vadd.f32 %v52, %v219
  %v221 = vpop.f32.mrb[0].mxu0
  %222 = vmatprep.mubr.bf16.mxu0 0
  %223 = vmatmul.mubr.bf16.gmra.mrb[0].mxu0 %v91
  %v224 = vpop.f32.mrb[0].mxu0
  %v225 = vadd.f32 %v52, %v224
  %v226 = vpop.f32.mrb[0].mxu0
  %v227 = vpop.f32.mrb[0].mxu0
  %v228 = vadd.f32 %v52, %v227
  %v229 = vpop.f32.mrb[0].mxu0
  %230 = vmatprep.mubr.bf16.mxu0 0
  %231 = vmatmul.mubr.bf16.gmra.mrb[0].mxu0 %v92
  %v232 = vpop.f32.mrb[0].mxu0
  %v233 = vadd.f32 %v52, %v232
  %v234 = vpop.f32.mrb[0].mxu0
  %v235 = vpop.f32.mrb[0].mxu0
  %v236 = vadd.f32 %v52, %v235
  %v237 = vpop.f32.mrb[0].mxu0
  %238 = vmatprep.mubr.bf16.mxu0 0
  %239 = vmatmul.mubr.bf16.gmra.mrb[0].mxu0 %v93
  %v240 = vpop.f32.mrb[0].mxu0
  %v241 = vadd.f32 %v52, %v240
  %v242 = vpop.f32.mrb[0].mxu0
  %v243 = vpop.f32.mrb[0].mxu0
  %v244 = vadd.f32 %v52, %v243
  %v245 = vpop.f32.mrb[0].mxu0
  %246 = vdwg.mxu0
  %vm247 = vcmp.ge.f32.partialorder %v185, 0.0
  %vm248 = vcmp.ge.f32.partialorder %v188, 0.0
  %vm249 = vcmp.ge.f32.partialorder %v193, 0.0
  %vm250 = vcmp.ge.f32.partialorder %v196, 0.0
  %vm251 = vcmp.ge.f32.partialorder %v201, 0.0
  %vm252 = vcmp.ge.f32.partialorder %v204, 0.0
  %vm253 = vcmp.ge.f32.partialorder %v209, 0.0
  %vm254 = vcmp.ge.f32.partialorder %v212, 0.0
  %vm255 = vcmp.ge.f32.partialorder %v217, 0.0
  %vm256 = vcmp.ge.f32.partialorder %v220, 0.0
  %vm257 = vcmp.ge.f32.partialorder %v225, 0.0
  %vm258 = vcmp.ge.f32.partialorder %v228, 0.0
  %vm259 = vcmp.ge.f32.partialorder %v233, 0.0
  %vm260 = vcmp.ge.f32.partialorder %v236, 0.0
  %vm261 = vcmp.ge.f32.partialorder %v241, 0.0
  %vm262 = vcmp.ge.f32.partialorder %v244, 0.0
  %v263 = vmul.f32 %v185, 0.25
  %v264 = vmul.f32 %v188, 0.25
  %v265 = vmul.f32 %v193, 0.25
  %v266 = vmul.f32 %v196, 0.25
  %v267 = vmul.f32 %v201, 0.25
  %v268 = vmul.f32 %v204, 0.25
  %v269 = vmul.f32 %v209, 0.25
  %v270 = vmul.f32 %v212, 0.25
  %v271 = vmul.f32 %v217, 0.25
  %v272 = vmul.f32 %v220, 0.25
  %v273 = vmul.f32 %v225, 0.25
  %v274 = vmul.f32 %v228, 0.25
  %v275 = vmul.f32 %v233, 0.25
  %v276 = vmul.f32 %v236, 0.25
  %v277 = vmul.f32 %v241, 0.25
  %v278 = vmul.f32 %v244, 0.25
  %v279 = vsel %vm247, %v185, %v263
  %v280 = vsel %vm248, %v188, %v264
  %v281 = vsel %vm249, %v193, %v265
  %v282 = vsel %vm250, %v196, %v266
  %v283 = vsel %vm251, %v201, %v267
  %v284 = vsel %vm252, %v204, %v268
  %v285 = vsel %vm253, %v209, %v269
  %v286 = vsel %vm254, %v212, %v270
  %v287 = vsel %vm255, %v217, %v271
  %v288 = vsel %vm256, %v220, %v272
  %v289 = vsel %vm257, %v225, %v273
  %v290 = vsel %vm258, %v228, %v274
  %v291 = vsel %vm259, %v233, %v275
  %v292 = vsel %vm260, %v236, %v276
  %v293 = vsel %vm261, %v241, %v277
  %v294 = vsel %vm262, %v244, %v278
  %v295 = vpack.c.bf16 %v280, %v279
  %v296 = vpack.c.bf16 %v282, %v281
  %v297 = vpack.c.bf16 %v284, %v283
  %v298 = vpack.c.bf16 %v286, %v285
  %v299 = vpack.c.bf16 %v288, %v287
  %v300 = vpack.c.bf16 %v290, %v289
  %v301 = vpack.c.bf16 %v292, %v291
  %v302 = vpack.c.bf16 %v294, %v293
  %v311 = vunpack.c.l.b16 %v295
  %v312 = vunpack.c.h.b16 %v295
  %v313 = vunpack.c.l.b16 %v296
  %v314 = vunpack.c.h.b16 %v296
  %v315 = vunpack.c.l.b16 %v297
  %v316 = vunpack.c.h.b16 %v297
  %v317 = vunpack.c.l.b16 %v298
  %v318 = vunpack.c.h.b16 %v298
  %v319 = vunpack.c.l.b16 %v299
  %v320 = vunpack.c.h.b16 %v299
  %v321 = vunpack.c.l.b16 %v300
  %v322 = vunpack.c.h.b16 %v300
  %v323 = vunpack.c.l.b16 %v301
  %v324 = vunpack.c.h.b16 %v301
  %v325 = vunpack.c.l.b16 %v302
  %v326 = vunpack.c.h.b16 %v302
  %v327 = vpack.c.b16 %v311, %v311
  %v328 = vpack.c.b16 %v312, %v312
  %v329 = vpack.c.b16 %v313, %v313
  %v330 = vpack.c.b16 %v314, %v314
  %v331 = vpack.c.b16 %v315, %v315
  %v332 = vpack.c.b16 %v316, %v316
  %v333 = vpack.c.b16 %v317, %v317
  %v334 = vpack.c.b16 %v318, %v318
  %v335 = vpack.c.b16 %v319, %v319
  %v336 = vpack.c.b16 %v320, %v320
  %v337 = vpack.c.b16 %v321, %v321
  %v338 = vpack.c.b16 %v322, %v322
  %v339 = vpack.c.b16 %v323, %v323
  %v340 = vpack.c.b16 %v324, %v324
  %v341 = vpack.c.b16 %v325, %v325
  %v342 = vpack.c.b16 %v326, %v326
  %359 = vst [vmem:[%s3] sm:$0xf] %v327
  %360 = vst [vmem:[%s3 + $0x4] sm:$0xf] %v328
  %361 = vst [vmem:[%s3 + $0x8] sm:$0xf] %v329
  %362 = vst [vmem:[%s3 + $0xc] sm:$0xf] %v330
  %363 = vst [vmem:[%s3 + $0x10] sm:$0xf] %v331
  %364 = vst [vmem:[%s3 + $0x14] sm:$0xf] %v332
  %365 = vst [vmem:[%s3 + $0x18] sm:$0xf] %v333
  %366 = vst [vmem:[%s3 + $0x1c] sm:$0xf] %v334
  %367 = vst [vmem:[%s3 + $0x20] sm:$0xf] %v335
  %368 = vst [vmem:[%s3 + $0x24] sm:$0xf] %v336
  %369 = vst [vmem:[%s3 + $0x28] sm:$0xf] %v337
  %370 = vst [vmem:[%s3 + $0x2c] sm:$0xf] %v338
  %371 = vst [vmem:[%s3 + $0x30] sm:$0xf] %v339
  %372 = vst [vmem:[%s3 + $0x34] sm:$0xf] %v340
  %373 = vst [vmem:[%s3 + $0x38] sm:$0xf] %v341
  %374 = vst [vmem:[%s3 + $0x3c] sm:$0xf] %v342
  // Predicated region
  $region14: #{gcn_e_2_forward.5} parent=0 // pred_check
    _
  $region15: #{gcn_e_2_forward.5} parent=0 // pred_check_branch
    %376 = sbr.rel (0) target = $region17
  $region16: #{gcn_e_2_forward.5} parent=0 // pred_region
    _
  $region17: #{gcn_e_2_forward.5} parent=0 // pred_fallthru
    _
  // Predicated region
  $region18: #{gcn_e_2_forward.5} parent=0 // pred_check
    _
  $region19: #{gcn_e_2_forward.5} parent=0 // pred_check_branch
    %378 = sbr.rel (0) target = $region21
  $region20: #{gcn_e_2_forward.5} parent=0 // pred_region
    _
  $region21: #{gcn_e_2_forward.5} parent=0 // pred_fallthru
    _

// kernel: gcn_e_2_forward.4
$region0: #{gcn_e_2_forward.4}
  #allocation0 [shape = 'u32[]', space=smem, size = 0x4, offset = 0x4, fixed_abs, tag = 'smem constant byte address 0x4 - core index']
  #allocation1 [shape = 'u32[144,128]{1,0:T(1,128)}', space=vmem, size = 0x12000, scoped, tag = 'internal scratch']
  %s0 = inlined_call_operand.vmem [shape: bf16[128,128], index: 0, kind: input, shape index: {}]
  %s1 = inlined_call_operand.vmem [shape: bf16[128,128], index: 1, kind: input, shape index: {}]
  %s2 = inlined_call_operand.vmem [shape: bf16[128,128], index: 2, kind: output, shape index: {}]
  %s3 = sld [smem:[#allocation0]]
  $region18: #{gcn_e_2_forward.4} parent=0
    _
  %s5 = ssub.s32 1, %s3
  %s6 = scalar_select 0, %s5, %s3
  // Predicated region
  $region2: #{gcn_e_2_forward.4} parent=0 // pred_check
    _
  $region3: #{gcn_e_2_forward.4} parent=0 // pred_check_branch
    %8 = sbr.rel (0) target = $region5
  $region4: #{gcn_e_2_forward.4} parent=0 // pred_region
    _
  $region5: #{gcn_e_2_forward.4} parent=0 // pred_fallthru
    _
  // Predicated region
  $region6: #{gcn_e_2_forward.4} parent=0 // pred_check
    _
  $region7: #{gcn_e_2_forward.4} parent=0 // pred_check_branch
    %10 = sbr.rel (0) target = $region9
  $region8: #{gcn_e_2_forward.4} parent=0 // pred_region
    _
  $region9: #{gcn_e_2_forward.4} parent=0 // pred_fallthru
    _
  %v12 = vld [vmem:[%s0] sm:$0xf]
  %v13 = vld [vmem:[%s0 + $0x4] sm:$0xf]
  %v14 = vld [vmem:[%s0 + $0x8] sm:$0xf]
  %v15 = vld [vmem:[%s0 + $0xc] sm:$0xf]
  %v16 = vld [vmem:[%s0 + $0x10] sm:$0xf]
  %v17 = vld [vmem:[%s0 + $0x14] sm:$0xf]
  %v18 = vld [vmem:[%s0 + $0x18] sm:$0xf]
  %v19 = vld [vmem:[%s0 + $0x1c] sm:$0xf]
  %v20 = vld [vmem:[%s0 + $0x20] sm:$0xf]
  %v21 = vld [vmem:[%s0 + $0x24] sm:$0xf]
  %v22 = vld [vmem:[%s0 + $0x28] sm:$0xf]
  %v23 = vld [vmem:[%s0 + $0x2c] sm:$0xf]
  %v24 = vld [vmem:[%s0 + $0x30] sm:$0xf]
  %v25 = vld [vmem:[%s0 + $0x34] sm:$0xf]
  %v26 = vld [vmem:[%s0 + $0x38] sm:$0xf]
  %v27 = vld [vmem:[%s0 + $0x3c] sm:$0xf]
  %v28 = vld [vmem:[%s1] sm:$0xf]
  %v29 = vld [vmem:[%s1 + $0x4] sm:$0xf]
  %v30 = vld [vmem:[%s1 + $0x8] sm:$0xf]
  %v31 = vld [vmem:[%s1 + $0xc] sm:$0xf]
  %v32 = vld [vmem:[%s1 + $0x10] sm:$0xf]
  %v33 = vld [vmem:[%s1 + $0x14] sm:$0xf]
  %v34 = vld [vmem:[%s1 + $0x18] sm:$0xf]
  %v35 = vld [vmem:[%s1 + $0x1c] sm:$0xf]
  %v36 = vld [vmem:[%s1 + $0x20] sm:$0xf]
  %v37 = vld [vmem:[%s1 + $0x24] sm:$0xf]
  %v38 = vld [vmem:[%s1 + $0x28] sm:$0xf]
  %v39 = vld [vmem:[%s1 + $0x2c] sm:$0xf]
  %v40 = vld [vmem:[%s1 + $0x30] sm:$0xf]
  %v41 = vld [vmem:[%s1 + $0x34] sm:$0xf]
  %v42 = vld [vmem:[%s1 + $0x38] sm:$0xf]
  %v43 = vld [vmem:[%s1 + $0x3c] sm:$0xf]
  %v60 = vunpack.c.l.b16 %v12
  %v61 = vunpack.c.l.b16 %v13
  %v62 = vunpack.c.l.b16 %v14
  %v63 = vunpack.c.l.b16 %v15
  %v64 = vunpack.c.l.b16 %v16
  %v65 = vunpack.c.l.b16 %v17
  %v66 = vunpack.c.l.b16 %v18
  %v67 = vunpack.c.l.b16 %v19
  %v68 = vunpack.c.l.b16 %v20
  %v69 = vunpack.c.l.b16 %v21
  %v70 = vunpack.c.l.b16 %v22
  %v71 = vunpack.c.l.b16 %v23
  %v72 = vunpack.c.l.b16 %v24
  %v73 = vunpack.c.l.b16 %v25
  %v74 = vunpack.c.l.b16 %v26
  %v75 = vunpack.c.l.b16 %v27
  %v76 = vpack.c.b16 %v61, %v60
  %v77 = vpack.c.b16 %v63, %v62
  %v78 = vpack.c.b16 %v65, %v64
  %v79 = vpack.c.b16 %v67, %v66
  %v80 = vpack.c.b16 %v69, %v68
  %v81 = vpack.c.b16 %v71, %v70
  %v82 = vpack.c.b16 %v73, %v72
  %v83 = vpack.c.b16 %v75, %v74
  %v108 = vunpack.c.l.b16 %v28
  %v109 = vunpack.c.l.b16 %v29
  %v110 = vunpack.c.l.b16 %v30
  %v111 = vunpack.c.l.b16 %v31
  %v112 = vunpack.c.l.b16 %v32
  %v113 = vunpack.c.l.b16 %v33
  %v114 = vunpack.c.l.b16 %v34
  %v115 = vunpack.c.l.b16 %v35
  %v116 = vunpack.c.l.b16 %v36
  %v117 = vunpack.c.l.b16 %v37
  %v118 = vunpack.c.l.b16 %v38
  %v119 = vunpack.c.l.b16 %v39
  %v120 = vunpack.c.l.b16 %v40
  %v121 = vunpack.c.l.b16 %v41
  %v122 = vunpack.c.l.b16 %v42
  %v123 = vunpack.c.l.b16 %v43
  %v124 = vpack.c.b16 %v109, %v108
  %v125 = vpack.c.b16 %v111, %v110
  %v126 = vpack.c.b16 %v113, %v112
  %v127 = vpack.c.b16 %v115, %v114
  %v128 = vpack.c.b16 %v117, %v116
  %v129 = vpack.c.b16 %v119, %v118
  %v130 = vpack.c.b16 %v121, %v120
  %v131 = vpack.c.b16 %v123, %v122
  %140 = vmatprep.subr.bf16.mxu0 0
  %141 = vmatpush1.bf16.msra.mxu0 %v124
  %142 = vmatprep.subr.bf16.mxu0 0
  %143 = vmatpush1.bf16.msra.mxu0 %v125
  %144 = vmatprep.subr.bf16.mxu0 0
  %145 = vmatpush1.bf16.msra.mxu0 %v126
  %146 = vmatprep.subr.bf16.mxu0 0
  %147 = vmatpush1.bf16.msra.mxu0 %v127
  %148 = vmatprep.subr.bf16.mxu0 0
  %149 = vmatpush1.bf16.msra.mxu0 %v128
  %150 = vmatprep.subr.bf16.mxu0 0
  %151 = vmatpush1.bf16.msra.mxu0 %v129
  %152 = vmatprep.subr.bf16.mxu0 0
  %153 = vmatpush1.bf16.msra.mxu0 %v130
  %154 = vmatprep.subr.bf16.mxu0 0
  %155 = vmatpush1.bf16.msra.mxu0 %v131
  %156 = vmatprep.subr.bf16.mxu0 0
  %157 = vmatpush1.bf16.msra.mxu0 0
  %158 = vmatprep.subr.bf16.mxu0 0
  %159 = vmatpush1.bf16.msra.mxu0 0
  %160 = vmatprep.subr.bf16.mxu0 0
  %161 = vmatpush1.bf16.msra.mxu0 0
  %162 = vmatprep.subr.bf16.mxu0 0
  %163 = vmatpush1.bf16.msra.mxu0 0
  %164 = vmatprep.subr.bf16.mxu0 0
  %165 = vmatpush1.bf16.msra.mxu0 0
  %166 = vmatprep.subr.bf16.mxu0 0
  %167 = vmatpush1.bf16.msra.mxu0 0
  %168 = vmatprep.subr.bf16.mxu0 0
  %169 = vmatpush1.bf16.msra.mxu0 0
  %170 = vmatprep.subr.bf16.mxu0 0
  %171 = vmatpush1.bf16.msra.mxu0 0
  %172 = vmatprep.mubr.bf16.mxu0 0
  %173 = vmatmul.mubr.bf16.gmra.mrb[0].mxu0 %v76
  %v174 = vpop.f32.mrb[0].mxu0
  %v175 = vadd.f32 0.0, %v174
  %v176 = vpop.f32.mrb[0].mxu0
  %v177 = vpop.f32.mrb[0].mxu0
  %v178 = vadd.f32 0.0, %v177
  %v179 = vpop.f32.mrb[0].mxu0
  %180 = vmatprep.mubr.bf16.mxu0 0
  %181 = vmatmul.mubr.bf16.gmra.mrb[0].mxu0 %v77
  %v182 = vpop.f32.mrb[0].mxu0
  %v183 = vadd.f32 0.0, %v182
  %v184 = vpop.f32.mrb[0].mxu0
  %v185 = vpop.f32.mrb[0].mxu0
  %v186 = vadd.f32 0.0, %v185
  %v187 = vpop.f32.mrb[0].mxu0
  %188 = vmatprep.mubr.bf16.mxu0 0
  %189 = vmatmul.mubr.bf16.gmra.mrb[0].mxu0 %v78
  %v190 = vpop.f32.mrb[0].mxu0
  %v191 = vadd.f32 0.0, %v190
  %v192 = vpop.f32.mrb[0].mxu0
  %v193 = vpop.f32.mrb[0].mxu0
  %v194 = vadd.f32 0.0, %v193
  %v195 = vpop.f32.mrb[0].mxu0
  %196 = vmatprep.mubr.bf16.mxu0 0
  %197 = vmatmul.mubr.bf16.gmra.mrb[0].mxu0 %v79
  %v198 = vpop.f32.mrb[0].mxu0
  %v199 = vadd.f32 0.0, %v198
  %v200 = vpop.f32.mrb[0].mxu0
  %v201 = vpop.f32.mrb[0].mxu0
  %v202 = vadd.f32 0.0, %v201
  %v203 = vpop.f32.mrb[0].mxu0
  %204 = vmatprep.mubr.bf16.mxu0 0
  %205 = vmatmul.mubr.bf16.gmra.mrb[0].mxu0 %v80
  %v206 = vpop.f32.mrb[0].mxu0
  %v207 = vadd.f32 0.0, %v206
  %v208 = vpop.f32.mrb[0].mxu0
  %v209 = vpop.f32.mrb[0].mxu0
  %v210 = vadd.f32 0.0, %v209
  %v211 = vpop.f32.mrb[0].mxu0
  %212 = vmatprep.mubr.bf16.mxu0 0
  %213 = vmatmul.mubr.bf16.gmra.mrb[0].mxu0 %v81
  %v214 = vpop.f32.mrb[0].mxu0
  %v215 = vadd.f32 0.0, %v214
  %v216 = vpop.f32.mrb[0].mxu0
  %v217 = vpop.f32.mrb[0].mxu0
  %v218 = vadd.f32 0.0, %v217
  %v219 = vpop.f32.mrb[0].mxu0
  %220 = vmatprep.mubr.bf16.mxu0 0
  %221 = vmatmul.mubr.bf16.gmra.mrb[0].mxu0 %v82
  %v222 = vpop.f32.mrb[0].mxu0
  %v223 = vadd.f32 0.0, %v222
  %v224 = vpop.f32.mrb[0].mxu0
  %v225 = vpop.f32.mrb[0].mxu0
  %v226 = vadd.f32 0.0, %v225
  %v227 = vpop.f32.mrb[0].mxu0
  %228 = vmatprep.mubr.bf16.mxu0 0
  %229 = vmatmul.mubr.bf16.gmra.mrb[0].mxu0 %v83
  %v230 = vpop.f32.mrb[0].mxu0
  %v231 = vadd.f32 0.0, %v230
  %v232 = vpop.f32.mrb[0].mxu0
  %v233 = vpop.f32.mrb[0].mxu0
  %v234 = vadd.f32 0.0, %v233
  %v235 = vpop.f32.mrb[0].mxu0
  %236 = vdwg.mxu0
  %v237 = vpack.c.bf16 %v178, %v175
  %v238 = vpack.c.bf16 %v186, %v183
  %v239 = vpack.c.bf16 %v194, %v191
  %v240 = vpack.c.bf16 %v202, %v199
  %v241 = vpack.c.bf16 %v210, %v207
  %v242 = vpack.c.bf16 %v218, %v215
  %v243 = vpack.c.bf16 %v226, %v223
  %v244 = vpack.c.bf16 %v234, %v231
  %v253 = vunpack.c.l.b16 %v237
  %v254 = vunpack.c.h.b16 %v237
  %v255 = vunpack.c.l.b16 %v238
  %v256 = vunpack.c.h.b16 %v238
  %v257 = vunpack.c.l.b16 %v239
  %v258 = vunpack.c.h.b16 %v239
  %v259 = vunpack.c.l.b16 %v240
  %v260 = vunpack.c.h.b16 %v240
  %v261 = vunpack.c.l.b16 %v241
  %v262 = vunpack.c.h.b16 %v241
  %v263 = vunpack.c.l.b16 %v242
  %v264 = vunpack.c.h.b16 %v242
  %v265 = vunpack.c.l.b16 %v243
  %v266 = vunpack.c.h.b16 %v243
  %v267 = vunpack.c.l.b16 %v244
  %v268 = vunpack.c.h.b16 %v244
  %v269 = vpack.c.b16 %v253, %v253
  %v270 = vpack.c.b16 %v254, %v254
  %v271 = vpack.c.b16 %v255, %v255
  %v272 = vpack.c.b16 %v256, %v256
  %v273 = vpack.c.b16 %v257, %v257
  %v274 = vpack.c.b16 %v258, %v258
  %v275 = vpack.c.b16 %v259, %v259
  %v276 = vpack.c.b16 %v260, %v260
  %v277 = vpack.c.b16 %v261, %v261
  %v278 = vpack.c.b16 %v262, %v262
  %v279 = vpack.c.b16 %v263, %v263
  %v280 = vpack.c.b16 %v264, %v264
  %v281 = vpack.c.b16 %v265, %v265
  %v282 = vpack.c.b16 %v266, %v266
  %v283 = vpack.c.b16 %v267, %v267
  %v284 = vpack.c.b16 %v268, %v268
  %301 = vst [vmem:[%s2] sm:$0xf] %v269
  %302 = vst [vmem:[%s2 + $0x4] sm:$0xf] %v270
  %303 = vst [vmem:[%s2 + $0x8] sm:$0xf] %v271
  %304 = vst [vmem:[%s2 + $0xc] sm:$0xf] %v272
  %305 = vst [vmem:[%s2 + $0x10] sm:$0xf] %v273
  %306 = vst [vmem:[%s2 + $0x14] sm:$0xf] %v274
  %307 = vst [vmem:[%s2 + $0x18] sm:$0xf] %v275
  %308 = vst [vmem:[%s2 + $0x1c] sm:$0xf] %v276
  %309 = vst [vmem:[%s2 + $0x20] sm:$0xf] %v277
  %310 = vst [vmem:[%s2 + $0x24] sm:$0xf] %v278
  %311 = vst [vmem:[%s2 + $0x28] sm:$0xf] %v279
  %312 = vst [vmem:[%s2 + $0x2c] sm:$0xf] %v280
  %313 = vst [vmem:[%s2 + $0x30] sm:$0xf] %v281
  %314 = vst [vmem:[%s2 + $0x34] sm:$0xf] %v282
  %315 = vst [vmem:[%s2 + $0x38] sm:$0xf] %v283
  %316 = vst [vmem:[%s2 + $0x3c] sm:$0xf] %v284
  // Predicated region
  $region10: #{gcn_e_2_forward.4} parent=0 // pred_check
    _
  $region11: #{gcn_e_2_forward.4} parent=0 // pred_check_branch
    %318 = sbr.rel (0) target = $region13
  $region12: #{gcn_e_2_forward.4} parent=0 // pred_region
    _
  $region13: #{gcn_e_2_forward.4} parent=0 // pred_fallthru
    _
  // Predicated region
  $region14: #{gcn_e_2_forward.4} parent=0 // pred_check
    _
  $region15: #{gcn_e_2_forward.4} parent=0 // pred_check_branch
    %320 = sbr.rel (0) target = $region17
  $region16: #{gcn_e_2_forward.4} parent=0 // pred_region
    _
  $region17: #{gcn_e_2_forward.4} parent=0 // pred_fallthru
    _

// kernel: gcn_e_2_forward.7
$region0: #{gcn_e_2_forward.7}
  #allocation0 [shape = 'u32[]', space=smem, size = 0x4, offset = 0x4, fixed_abs, tag = 'smem constant byte address 0x4 - core index']
  #allocation1 [shape = 'u32[144,128]{1,0:T(1,128)}', space=vmem, size = 0x12000, scoped, tag = 'internal scratch']
  %s0 = inlined_call_operand.vmem [shape: bf16[128,128], index: 0, kind: input, shape index: {}]
  %s1 = inlined_call_operand.vmem [shape: bf16[128,128], index: 1, kind: input, shape index: {}]
  %s2 = inlined_call_operand.vmem [shape: f32[1,128], index: 2, kind: input, shape index: {}]
  %s3 = inlined_call_operand.vmem [shape: f32[128,128], index: 3, kind: output, shape index: {}]
  %s4 = sld [smem:[#allocation0]]
  $region22: #{gcn_e_2_forward.7} parent=0
    _
  %s6 = ssub.s32 1, %s4
  %s7 = scalar_select 0, %s6, %s4
  // Predicated region
  $region2: #{gcn_e_2_forward.7} parent=0 // pred_check
    _
  $region3: #{gcn_e_2_forward.7} parent=0 // pred_check_branch
    %9 = sbr.rel (0) target = $region5
  $region4: #{gcn_e_2_forward.7} parent=0 // pred_region
    _
  $region5: #{gcn_e_2_forward.7} parent=0 // pred_fallthru
    _
  // Predicated region
  $region6: #{gcn_e_2_forward.7} parent=0 // pred_check
    _
  $region7: #{gcn_e_2_forward.7} parent=0 // pred_check_branch
    %11 = sbr.rel (0) target = $region9
  $region8: #{gcn_e_2_forward.7} parent=0 // pred_region
    _
  $region9: #{gcn_e_2_forward.7} parent=0 // pred_fallthru
    _
  // Predicated region
  $region10: #{gcn_e_2_forward.7} parent=0 // pred_check
    _
  $region11: #{gcn_e_2_forward.7} parent=0 // pred_check_branch
    %13 = sbr.rel (0) target = $region13
  $region12: #{gcn_e_2_forward.7} parent=0 // pred_region
    _
  $region13: #{gcn_e_2_forward.7} parent=0 // pred_fallthru
    _
  %v15 = vld [vmem:[%s0] sm:$0xf]
  %v16 = vld [vmem:[%s0 + $0x4] sm:$0xf]
  %v17 = vld [vmem:[%s0 + $0x8] sm:$0xf]
  %v18 = vld [vmem:[%s0 + $0xc] sm:$0xf]
  %v19 = vld [vmem:[%s0 + $0x10] sm:$0xf]
  %v20 = vld [vmem:[%s0 + $0x14] sm:$0xf]
  %v21 = vld [vmem:[%s0 + $0x18] sm:$0xf]
  %v22 = vld [vmem:[%s0 + $0x1c] sm:$0xf]
  %v23 = vld [vmem:[%s0 + $0x20] sm:$0xf]
  %v24 = vld [vmem:[%s0 + $0x24] sm:$0xf]
  %v25 = vld [vmem:[%s0 + $0x28] sm:$0xf]
  %v26 = vld [vmem:[%s0 + $0x2c] sm:$0xf]
  %v27 = vld [vmem:[%s0 + $0x30] sm:$0xf]
  %v28 = vld [vmem:[%s0 + $0x34] sm:$0xf]
  %v29 = vld [vmem:[%s0 + $0x38] sm:$0xf]
  %v30 = vld [vmem:[%s0 + $0x3c] sm:$0xf]
  %v31 = vld [vmem:[%s1] sm:$0xf]
  %v32 = vld [vmem:[%s1 + $0x4] sm:$0xf]
  %v33 = vld [vmem:[%s1 + $0x8] sm:$0xf]
  %v34 = vld [vmem:[%s1 + $0xc] sm:$0xf]
  %v35 = vld [vmem:[%s1 + $0x10] sm:$0xf]
  %v36 = vld [vmem:[%s1 + $0x14] sm:$0xf]
  %v37 = vld [vmem:[%s1 + $0x18] sm:$0xf]
  %v38 = vld [vmem:[%s1 + $0x1c] sm:$0xf]
  %v39 = vld [vmem:[%s1 + $0x20] sm:$0xf]
  %v40 = vld [vmem:[%s1 + $0x24] sm:$0xf]
  %v41 = vld [vmem:[%s1 + $0x28] sm:$0xf]
  %v42 = vld [vmem:[%s1 + $0x2c] sm:$0xf]
  %v43 = vld [vmem:[%s1 + $0x30] sm:$0xf]
  %v44 = vld [vmem:[%s1 + $0x34] sm:$0xf]
  %v45 = vld [vmem:[%s1 + $0x38] sm:$0xf]
  %v46 = vld [vmem:[%s1 + $0x3c] sm:$0xf]
  %v47 = vld [vmem:[%s2] sm:$0x1]
  %v49 = vlaneseq
  %v50 = vshrl.u32 %v49, 7
  %v51 = vsub.s32 0, %v50
  %v52 = vrot.slane %v47, %v51
  %v70 = vunpack.c.l.b16 %v15
  %v71 = vunpack.c.l.b16 %v16
  %v72 = vunpack.c.l.b16 %v17
  %v73 = vunpack.c.l.b16 %v18
  %v74 = vunpack.c.l.b16 %v19
  %v75 = vunpack.c.l.b16 %v20
  %v76 = vunpack.c.l.b16 %v21
  %v77 = vunpack.c.l.b16 %v22
  %v78 = vunpack.c.l.b16 %v23
  %v79 = vunpack.c.l.b16 %v24
  %v80 = vunpack.c.l.b16 %v25
  %v81 = vunpack.c.l.b16 %v26
  %v82 = vunpack.c.l.b16 %v27
  %v83 = vunpack.c.l.b16 %v28
  %v84 = vunpack.c.l.b16 %v29
  %v85 = vunpack.c.l.b16 %v30
  %v86 = vpack.c.b16 %v71, %v70
  %v87 = vpack.c.b16 %v73, %v72
  %v88 = vpack.c.b16 %v75, %v74
  %v89 = vpack.c.b16 %v77, %v76
  %v90 = vpack.c.b16 %v79, %v78
  %v91 = vpack.c.b16 %v81, %v80
  %v92 = vpack.c.b16 %v83, %v82
  %v93 = vpack.c.b16 %v85, %v84
  %v118 = vunpack.c.l.b16 %v31
  %v119 = vunpack.c.l.b16 %v32
  %v120 = vunpack.c.l.b16 %v33
  %v121 = vunpack.c.l.b16 %v34
  %v122 = vunpack.c.l.b16 %v35
  %v123 = vunpack.c.l.b16 %v36
  %v124 = vunpack.c.l.b16 %v37
  %v125 = vunpack.c.l.b16 %v38
  %v126 = vunpack.c.l.b16 %v39
  %v127 = vunpack.c.l.b16 %v40
  %v128 = vunpack.c.l.b16 %v41
  %v129 = vunpack.c.l.b16 %v42
  %v130 = vunpack.c.l.b16 %v43
  %v131 = vunpack.c.l.b16 %v44
  %v132 = vunpack.c.l.b16 %v45
  %v133 = vunpack.c.l.b16 %v46
  %v134 = vpack.c.b16 %v119, %v118
  %v135 = vpack.c.b16 %v121, %v120
  %v136 = vpack.c.b16 %v123, %v122
  %v137 = vpack.c.b16 %v125, %v124
  %v138 = vpack.c.b16 %v127, %v126
  %v139 = vpack.c.b16 %v129, %v128
  %v140 = vpack.c.b16 %v131, %v130
  %v141 = vpack.c.b16 %v133, %v132
  %150 = vmatprep.subr.bf16.mxu0 0
  %151 = vmatpush1.bf16.msra.mxu0 %v134
  %152 = vmatprep.subr.bf16.mxu0 0
  %153 = vmatpush1.bf16.msra.mxu0 %v135
  %154 = vmatprep.subr.bf16.mxu0 0
  %155 = vmatpush1.bf16.msra.mxu0 %v136
  %156 = vmatprep.subr.bf16.mxu0 0
  %157 = vmatpush1.bf16.msra.mxu0 %v137
  %158 = vmatprep.subr.bf16.mxu0 0
  %159 = vmatpush1.bf16.msra.mxu0 %v138
  %160 = vmatprep.subr.bf16.mxu0 0
  %161 = vmatpush1.bf16.msra.mxu0 %v139
  %162 = vmatprep.subr.bf16.mxu0 0
  %163 = vmatpush1.bf16.msra.mxu0 %v140
  %164 = vmatprep.subr.bf16.mxu0 0
  %165 = vmatpush1.bf16.msra.mxu0 %v141
  %166 = vmatprep.subr.bf16.mxu0 0
  %167 = vmatpush1.bf16.msra.mxu0 0
  %168 = vmatprep.subr.bf16.mxu0 0
  %169 = vmatpush1.bf16.msra.mxu0 0
  %170 = vmatprep.subr.bf16.mxu0 0
  %171 = vmatpush1.bf16.msra.mxu0 0
  %172 = vmatprep.subr.bf16.mxu0 0
  %173 = vmatpush1.bf16.msra.mxu0 0
  %174 = vmatprep.subr.bf16.mxu0 0
  %175 = vmatpush1.bf16.msra.mxu0 0
  %176 = vmatprep.subr.bf16.mxu0 0
  %177 = vmatpush1.bf16.msra.mxu0 0
  %178 = vmatprep.subr.bf16.mxu0 0
  %179 = vmatpush1.bf16.msra.mxu0 0
  %180 = vmatprep.subr.bf16.mxu0 0
  %181 = vmatpush1.bf16.msra.mxu0 0
  %182 = vmatprep.mubr.bf16.mxu0 0
  %183 = vmatmul.mubr.bf16.gmra.mrb[0].mxu0 %v86
  %v184 = vpop.f32.mrb[0].mxu0
  %v185 = vadd.f32 %v52, %v184
  %v186 = vpop.f32.mrb[0].mxu0
  %v187 = vpop.f32.mrb[0].mxu0
  %v188 = vadd.f32 %v52, %v187
  %v189 = vpop.f32.mrb[0].mxu0
  %190 = vmatprep.mubr.bf16.mxu0 0
  %191 = vmatmul.mubr.bf16.gmra.mrb[0].mxu0 %v87
  %v192 = vpop.f32.mrb[0].mxu0
  %v193 = vadd.f32 %v52, %v192
  %v194 = vpop.f32.mrb[0].mxu0
  %v195 = vpop.f32.mrb[0].mxu0
  %v196 = vadd.f32 %v52, %v195
  %v197 = vpop.f32.mrb[0].mxu0
  %198 = vmatprep.mubr.bf16.mxu0 0
  %199 = vmatmul.mubr.bf16.gmra.mrb[0].mxu0 %v88
  %v200 = vpop.f32.mrb[0].mxu0
  %v201 = vadd.f32 %v52, %v200
  %v202 = vpop.f32.mrb[0].mxu0
  %v203 = vpop.f32.mrb[0].mxu0
  %v204 = vadd.f32 %v52, %v203
  %v205 = vpop.f32.mrb[0].mxu0
  %206 = vmatprep.mubr.bf16.mxu0 0
  %207 = vmatmul.mubr.bf16.gmra.mrb[0].mxu0 %v89
  %v208 = vpop.f32.mrb[0].mxu0
  %v209 = vadd.f32 %v52, %v208
  %v210 = vpop.f32.mrb[0].mxu0
  %v211 = vpop.f32.mrb[0].mxu0
  %v212 = vadd.f32 %v52, %v211
  %v213 = vpop.f32.mrb[0].mxu0
  %214 = vmatprep.mubr.bf16.mxu0 0
  %215 = vmatmul.mubr.bf16.gmra.mrb[0].mxu0 %v90
  %v216 = vpop.f32.mrb[0].mxu0
  %v217 = vadd.f32 %v52, %v216
  %v218 = vpop.f32.mrb[0].mxu0
  %v219 = vpop.f32.mrb[0].mxu0
  %v220 = vadd.f32 %v52, %v219
  %v221 = vpop.f32.mrb[0].mxu0
  %222 = vmatprep.mubr.bf16.mxu0 0
  %223 = vmatmul.mubr.bf16.gmra.mrb[0].mxu0 %v91
  %v224 = vpop.f32.mrb[0].mxu0
  %v225 = vadd.f32 %v52, %v224
  %v226 = vpop.f32.mrb[0].mxu0
  %v227 = vpop.f32.mrb[0].mxu0
  %v228 = vadd.f32 %v52, %v227
  %v229 = vpop.f32.mrb[0].mxu0
  %230 = vmatprep.mubr.bf16.mxu0 0
  %231 = vmatmul.mubr.bf16.gmra.mrb[0].mxu0 %v92
  %v232 = vpop.f32.mrb[0].mxu0
  %v233 = vadd.f32 %v52, %v232
  %v234 = vpop.f32.mrb[0].mxu0
  %v235 = vpop.f32.mrb[0].mxu0
  %v236 = vadd.f32 %v52, %v235
  %v237 = vpop.f32.mrb[0].mxu0
  %238 = vmatprep.mubr.bf16.mxu0 0
  %239 = vmatmul.mubr.bf16.gmra.mrb[0].mxu0 %v93
  %v240 = vpop.f32.mrb[0].mxu0
  %v241 = vadd.f32 %v52, %v240
  %v242 = vpop.f32.mrb[0].mxu0
  %v243 = vpop.f32.mrb[0].mxu0
  %v244 = vadd.f32 %v52, %v243
  %v245 = vpop.f32.mrb[0].mxu0
  %246 = vdwg.mxu0
  %vm247 = vcmp.ge.f32.partialorder %v185, 0.0
  %vm248 = vcmp.ge.f32.partialorder %v188, 0.0
  %vm249 = vcmp.ge.f32.partialorder %v193, 0.0
  %vm250 = vcmp.ge.f32.partialorder %v196, 0.0
  %vm251 = vcmp.ge.f32.partialorder %v201, 0.0
  %vm252 = vcmp.ge.f32.partialorder %v204, 0.0
  %vm253 = vcmp.ge.f32.partialorder %v209, 0.0
  %vm254 = vcmp.ge.f32.partialorder %v212, 0.0
  %vm255 = vcmp.ge.f32.partialorder %v217, 0.0
  %vm256 = vcmp.ge.f32.partialorder %v220, 0.0
  %vm257 = vcmp.ge.f32.partialorder %v225, 0.0
  %vm258 = vcmp.ge.f32.partialorder %v228, 0.0
  %vm259 = vcmp.ge.f32.partialorder %v233, 0.0
  %vm260 = vcmp.ge.f32.partialorder %v236, 0.0
  %vm261 = vcmp.ge.f32.partialorder %v241, 0.0
  %vm262 = vcmp.ge.f32.partialorder %v244, 0.0
  %v263 = vmul.f32 %v185, 0.25
  %v264 = vmul.f32 %v188, 0.25
  %v265 = vmul.f32 %v193, 0.25
  %v266 = vmul.f32 %v196, 0.25
  %v267 = vmul.f32 %v201, 0.25
  %v268 = vmul.f32 %v204, 0.25
  %v269 = vmul.f32 %v209, 0.25
  %v270 = vmul.f32 %v212, 0.25
  %v271 = vmul.f32 %v217, 0.25
  %v272 = vmul.f32 %v220, 0.25
  %v273 = vmul.f32 %v225, 0.25
  %v274 = vmul.f32 %v228, 0.25
  %v275 = vmul.f32 %v233, 0.25
  %v276 = vmul.f32 %v236, 0.25
  %v277 = vmul.f32 %v241, 0.25
  %v278 = vmul.f32 %v244, 0.25
  %v279 = vsel %vm247, %v185, %v263
  %v280 = vsel %vm248, %v188, %v264
  %v281 = vsel %vm249, %v193, %v265
  %v282 = vsel %vm250, %v196, %v266
  %v283 = vsel %vm251, %v201, %v267
  %v284 = vsel %vm252, %v204, %v268
  %v285 = vsel %vm253, %v209, %v269
  %v286 = vsel %vm254, %v212, %v270
  %v287 = vsel %vm255, %v217, %v271
  %v288 = vsel %vm256, %v220, %v272
  %v289 = vsel %vm257, %v225, %v273
  %v290 = vsel %vm258, %v228, %v274
  %v291 = vsel %vm259, %v233, %v275
  %v292 = vsel %vm260, %v236, %v276
  %v293 = vsel %vm261, %v241, %v277
  %v294 = vsel %vm262, %v244, %v278
  %295 = vst [vmem:[%s3] sm:$0xff] %v279
  %296 = vst [vmem:[%s3 + $0x8] sm:$0xff] %v280
  %297 = vst [vmem:[%s3 + $0x10] sm:$0xff] %v281
  %298 = vst [vmem:[%s3 + $0x18] sm:$0xff] %v282
  %299 = vst [vmem:[%s3 + $0x20] sm:$0xff] %v283
  %300 = vst [vmem:[%s3 + $0x28] sm:$0xff] %v284
  %301 = vst [vmem:[%s3 + $0x30] sm:$0xff] %v285
  %302 = vst [vmem:[%s3 + $0x38] sm:$0xff] %v286
  %303 = vst [vmem:[%s3 + $0x40] sm:$0xff] %v287
  %304 = vst [vmem:[%s3 + $0x48] sm:$0xff] %v288
  %305 = vst [vmem:[%s3 + $0x50] sm:$0xff] %v289
  %306 = vst [vmem:[%s3 + $0x58] sm:$0xff] %v290
  %307 = vst [vmem:[%s3 + $0x60] sm:$0xff] %v291
  %308 = vst [vmem:[%s3 + $0x68] sm:$0xff] %v292
  %309 = vst [vmem:[%s3 + $0x70] sm:$0xff] %v293
  %310 = vst [vmem:[%s3 + $0x78] sm:$0xff] %v294
  // Predicated region
  $region14: #{gcn_e_2_forward.7} parent=0 // pred_check
    _
  $region15: #{gcn_e_2_forward.7} parent=0 // pred_check_branch
    %312 = sbr.rel (0) target = $region17
  $region16: #{gcn_e_2_forward.7} parent=0 // pred_region
    _
  $region17: #{gcn_e_2_forward.7} parent=0 // pred_fallthru
    _
  // Predicated region
  $region18: #{gcn_e_2_forward.7} parent=0 // pred_check
    _
  $region19: #{gcn_e_2_forward.7} parent=0 // pred_check_branch
    %314 = sbr.rel (0) target = $region21
  $region20: #{gcn_e_2_forward.7} parent=0 // pred_region
    _
  $region21: #{gcn_e_2_forward.7} parent=0 // pred_fallthru
    _

</llo_original>
